<compile_context>
chip_gen: v5e
topology: v5e:2x2
jax: 0.10.0
libtpu: 0.0.40
codegen_flags: <defaults>
</compile_context>

<pallas_src>
import jax
import jax.numpy as jnp
from jax import lax
from jax.experimental import pallas as pl
from jax.experimental.pallas import tpu as pltpu


def _round_up(x: int, m: int) -> int:
    return (x + m - 1) // m * m


def _linear_kernel(x_ref, w_ref, b_ref, o_ref):
    # x_ref: (TB, D_in_p)        activations tile
    # w_ref: (D_out_p, D_in_p)   weight in PyTorch layout, VMEM-resident
    # b_ref: (1, D_out_p)        bias row
    # o_ref: (TB, D_out_p)
    acc = lax.dot_general(
        x_ref[...], w_ref[...],
        dimension_numbers=(((1,), (1,)), ((), ())),   # contract shared D_in
        preferred_element_type=jnp.float32,
    )
    o_ref[...] = (acc + b_ref[...]).astype(o_ref.dtype)


def gin_mlp_forward(x, weight_pt, bias, *, tb: int = 128):
    """Computes x @ weight_pt.T + bias (PyTorch nn.Linear semantics).

    x: (B, D_in); weight_pt: (D_out, D_in) PyTorch layout; bias: (D_out,).
    """
    B, D_in = x.shape
    D_out = weight_pt.shape[0]

    # Lane-dense padding: last dims to multiples of 128, batch tile to mult of 8.
    D_in_p = _round_up(D_in, 128)
    D_out_p = _round_up(D_out, 128)
    TB = min(tb, _round_up(B, 8))
    B_p = _round_up(B, TB)

    if (B_p, D_in_p) != (B, D_in):
        x_p = jnp.pad(x, ((0, B_p - B), (0, D_in_p - D_in)))
    else:
        x_p = x
    if (D_out_p, D_in_p) != (D_out, D_in):
        w_p = jnp.pad(weight_pt, ((0, D_out_p - D_out), (0, D_in_p - D_in)))
    else:
        w_p = weight_pt
    b_p = jnp.pad(bias, (0, D_out_p - D_out)) if D_out_p != D_out else bias
    b2 = b_p.reshape(1, D_out_p)

    grid = (B_p // TB,)

    out_p = pl.pallas_call(
        _linear_kernel,
        out_shape=jax.ShapeDtypeStruct((B_p, D_out_p), x.dtype),
        grid_spec=pl.GridSpec(
            grid=grid,
            in_specs=[
                pl.BlockSpec((TB, D_in_p), lambda i: (i, 0)),        # x tile
                pl.BlockSpec((D_out_p, D_in_p), lambda i: (0, 0)),   # resident W
                pl.BlockSpec((1, D_out_p), lambda i: (0, 0)),        # resident b
            ],
            out_specs=pl.BlockSpec((TB, D_out_p), lambda i: (i, 0)),
        ),
        compiler_params=pltpu.CompilerParams(
            dimension_semantics=("parallel",),
        ),
    )(x_p, w_p, b2)

    return out_p[:B, :D_out]


if __name__ == "__main__":
    key = jax.random.PRNGKey(0)
    B, D_in, D_out = 256, 32, 64   # several batch tiles -> pipelined grid

    kx, kw, kb = jax.random.split(key, 3)
    x = jax.random.normal(kx, (B, D_in), dtype=jnp.float32)

    # Deterministic init mimicking torch.nn.Linear: U(-1/sqrt(D_in), 1/sqrt(D_in))
    bound = 1.0 / (D_in ** 0.5)
    weight_pt = jax.random.uniform(kw, (D_out, D_in), jnp.float32, -bound, bound)
    bias = jax.random.uniform(kb, (D_out,), jnp.float32, -bound, bound)

    out = gin_mlp_forward(x, weight_pt, bias)
    out = jax.block_until_ready(out)

    # Reference check against plain JAX linear (PyTorch semantics).
    ref = x @ weight_pt.T + bias
    assert out.shape == (B, D_out)
    assert jnp.allclose(out, ref, atol=1e-4, rtol=1e-4)

    print("KERNEL_OK")
</pallas_src>

<mosaic_0001>
module attributes {stable_mosaic.version = 11 : i64} {
  func.func @_linear_kernel(%arg0: i32, %arg1: memref<128x128xf32, #tpu.memory_space<vmem>>, %arg2: memref<128x128xf32, #tpu.memory_space<vmem>>, %arg3: memref<1x128xf32, #tpu.memory_space<vmem>>, %arg4: memref<128x128xf32, #tpu.memory_space<vmem>>) attributes {dimension_semantics = [#tpu.dimension_semantics<parallel>], iteration_bounds = array<i64: 2>, scalar_prefetch = 0 : i64, scratch_operands = 0 : i64, tpu.core_type = #tpu.core_type<tc>, window_params = [{transform_indices = @transform_0, window_bounds = array<i64: 128, 128>}, {pipeline_mode = #tpu.pipeline_mode<synchronous>, transform_indices = @transform_1, window_bounds = array<i64: 128, 128>}, {pipeline_mode = #tpu.pipeline_mode<synchronous>, transform_indices = @transform_2, window_bounds = array<i64: 1, 128>}, {transform_indices = @transform_3, window_bounds = array<i64: 128, 128>}]} {
    %c0 = arith.constant 0 : index
    %c0_0 = arith.constant 0 : index
    %0 = vector.load %arg1[%c0, %c0_0] : memref<128x128xf32, #tpu.memory_space<vmem>>, vector<128x128xf32>
    %c0_1 = arith.constant 0 : index
    %c0_2 = arith.constant 0 : index
    %1 = vector.load %arg2[%c0_1, %c0_2] : memref<128x128xf32, #tpu.memory_space<vmem>>, vector<128x128xf32>
    %cst = arith.constant dense<0.000000e+00> : vector<128x128xf32>
    %2 = tpu.matmul %0, %1, %cst {dimension_numbers = #tpu.dot_dimension_numbers<[1], [1], [0], [0], [0, 0, 1, 0], [], []>} : vector<128x128xf32>, vector<128x128xf32>, vector<128x128xf32> -> vector<128x128xf32>
    %c0_3 = arith.constant 0 : index
    %c0_4 = arith.constant 0 : index
    %3 = vector.load %arg3[%c0_3, %c0_4] : memref<1x128xf32, #tpu.memory_space<vmem>>, vector<1x128xf32>
    %4 = vector.broadcast %3 : vector<1x128xf32> to vector<128x128xf32>
    %5 = arith.addf %2, %4 : vector<128x128xf32>
    %c0_5 = arith.constant 0 : index
    %c0_6 = arith.constant 0 : index
    %6 = vector.load %arg4[%c0_5, %c0_6] : memref<128x128xf32, #tpu.memory_space<vmem>>, vector<128x128xf32>
    tpu.vector_store %arg4[%c0_5, %c0_6], %5 {strides = array<i32>} : memref<128x128xf32, #tpu.memory_space<vmem>>, vector<128x128xf32>,
    return
  }
  func.func @transform_0(%arg0: i32) -> (i32, i32) {
    %c0_i32 = arith.constant 0 : i32
    %c0_i32_0 = arith.constant 0 : i32
    return %arg0, %c0_i32 : i32, i32
  }
  func.func @transform_1(%arg0: i32) -> (i32, i32) {
    %c0_i32 = arith.constant 0 : i32
    %c0_i32_0 = arith.constant 0 : i32
    %c0_i32_1 = arith.constant 0 : i32
    return %c0_i32, %c0_i32_0 : i32, i32
  }
  func.func @transform_2(%arg0: i32) -> (i32, i32) {
    %c0_i32 = arith.constant 0 : i32
    %c0_i32_0 = arith.constant 0 : i32
    %c0_i32_1 = arith.constant 0 : i32
    return %c0_i32, %c0_i32_0 : i32, i32
  }
  func.func @transform_3(%arg0: i32) -> (i32, i32) {
    %c0_i32 = arith.constant 0 : i32
    %c0_i32_0 = arith.constant 0 : i32
    return %arg0, %c0_i32 : i32, i32
  }
}

</mosaic_0001>

<llo_original>
// kernel: tpu_custom_call.1
$region0: #{tpu_custom_call.1}
  #allocation0 [shape = 'u32[]', space=smem, size = 0x4, offset = 0x4, fixed_abs, tag = 'smem constant byte address 0x4 - core index']
  #allocation1 [shape = 'u32[72,128]{1,0:T(1,128)}', space=vmem, size = 0x9000, scoped, tag = 'internal scratch']
  %s0 = inlined_call_operand.hbm [shape: f32[256,128], index: 0, kind: input, shape index: {}]
  %s1 = inlined_call_operand.hbm [shape: f32[128,128], index: 1, kind: input, shape index: {}]
  %s2 = inlined_call_operand.vmem [shape: f32[1,128], index: 2, kind: input, shape index: {}]
  %s3 = inlined_call_operand.hbm [shape: f32[256,128], index: 3, kind: output, shape index: {}]
  %s4 = sld [smem:[#allocation0]]
  $region53: #{tpu_custom_call.1} parent=0
    _
  %s6 = ssub.s32 1, %s4
  %s7 = scalar_select 0, %s6, %s4
  $region1: #{tpu_custom_call.1} parent=0
    #allocation2 [shape = 'u8[131072]{0}', space=vmem, size = 0x20000, scoped, tag = 'input window, operand 0']
    #allocation3 [shape = 's32[2]{0}', space=sflag, size = 0x8, scoped, tag = 'scoped memory for tpu_custom_call.1']
    #allocation4 [shape = 's32[2]{0}', space=sflag, size = 0x8, scoped, tag = 'scoped memory for tpu_custom_call.1']
    #allocation5 [shape = 'u8[65536]{0}', space=vmem, size = 0x10000, scoped, tag = 'input window, operand 1, single buffered']
    #allocation6 [shape = 's32[1]{0}', space=sflag, size = 0x4, scoped, tag = 'scoped memory for tpu_custom_call.1']
    #allocation7 [shape = 'u8[131072]{0}', space=vmem, size = 0x20000, scoped, tag = 'output window, operand 0']
    %8 = vsyncpa [#allocation3], 0
    %s9 = scalar_lea.sflag [#allocation3], 1
    %10 = vsyncpa %s9, 0
    %11 = vsyncpa [#allocation6], 0
    %12 = vsyncpa [#allocation4], 0
    %s13 = scalar_lea.sflag [#allocation4], 1
    %14 = vsyncpa %s13, 0
    loop: start=0, step=1, limit=4
    $region2: #{tpu_custom_call.1} parent=1 // loop_pre_header
      _
    $region3: #{tpu_custom_call.1} parent=1 // loop_header
      %s16 = sphi 0, %s20
      %p17 = scmp.ge.s32.totalorder %s16, 4
      %s26 = sphi 0, %s28
      %s29 = sphi 0, %s26
      %s30 = sphi 0, %s29
      %s46 = sphi 0, %s30
      %s50 = sphi 0, %s50
      %s52 = sphi 0, %s50
      %s53 = sphi 0, %s52
      %s67 = sphi 0, %s53
      %s71 = sphi 0, %s71
      %s73 = sphi 0, %s71
      %s74 = sphi 0, %s73
      %s88 = sphi 0, %s74
      %s94 = sphi 0, %s96
      %s97 = sphi 0, %s94
      %s98 = sphi 0, %s97
      %s114 = sphi 0, %s98
    $region4: #{tpu_custom_call.1} parent=1 // loop_header_branch
      %19 = sbr.rel (%p17) target = $region8
    $region5: #{tpu_custom_call.1} parent=1 // loop_body
      %s21 = ssub.s32 %s16, 1
      %s22 = ssub.s32 %s16, 2
      %s23 = sadd.s32 %s16, 1
      %s24 = ssub.s32 %s16, %s23
      %p25 = scmp.eq.s32.totalorder %s24, 0
      %s27 = sadd.s32 %s26, 1
      %s28 = scalar_select %p25, %s26, %s27
      %p31 = pneg %p25
      %p32 = scmp.eq.s32.totalorder %s16, 1
      %p33 = por %p31, %p32
      %p34 = scmp.ne.s32.totalorder %s26, %s29
      %p35 = scmp.eq.s32.totalorder %s16, 0
      %p36 = por %p34, %p35
      %p37 = scmp.ne.s32.totalorder %s26, %s29
      %p38 = scmp.eq.s32.totalorder %s21, 1
      %p39 = por %p37, %p38
      %p40 = scmp.ne.s32.totalorder %s29, %s30
      %p41 = scmp.eq.s32.totalorder %s21, 0
      %p42 = por %p40, %p41
      %p43 = scmp.ne.s32.totalorder %s29, %s30
      %p44 = scmp.eq.s32.totalorder %s22, 1
      %p45 = por %p43, %p44
      %p47 = scmp.ne.s32.totalorder %s30, %s46
      %p48 = scmp.eq.s32.totalorder %s22, 0
      %p49 = por %p47, %p48
      %s51 = sadd.s32 %s50, 1
      %p54 = scmp.eq.s32.totalorder %s16, 1
      %p55 = scmp.ne.s32.totalorder %s50, %s52
      %p56 = scmp.eq.s32.totalorder %s16, 0
      %p57 = por %p55, %p56
      %p58 = scmp.ne.s32.totalorder %s50, %s52
      %p59 = scmp.eq.s32.totalorder %s21, 1
      %p60 = por %p58, %p59
      %p61 = scmp.ne.s32.totalorder %s52, %s53
      %p62 = scmp.eq.s32.totalorder %s21, 0
      %p63 = por %p61, %p62
      %p64 = scmp.ne.s32.totalorder %s52, %s53
      %p65 = scmp.eq.s32.totalorder %s22, 1
      %p66 = por %p64, %p65
      %p68 = scmp.ne.s32.totalorder %s53, %s67
      %p69 = scmp.eq.s32.totalorder %s22, 0
      %p70 = por %p68, %p69
      %s72 = sadd.s32 %s71, 1
      %p75 = scmp.eq.s32.totalorder %s16, 1
      %p76 = scmp.ne.s32.totalorder %s71, %s73
      %p77 = scmp.eq.s32.totalorder %s16, 0
      %p78 = por %p76, %p77
      %p79 = scmp.ne.s32.totalorder %s71, %s73
      %p80 = scmp.eq.s32.totalorder %s21, 1
      %p81 = por %p79, %p80
      %p82 = scmp.ne.s32.totalorder %s73, %s74
      %p83 = scmp.eq.s32.totalorder %s21, 0
      %p84 = por %p82, %p83
      %p85 = scmp.ne.s32.totalorder %s73, %s74
      %p86 = scmp.eq.s32.totalorder %s22, 1
      %p87 = por %p85, %p86
      %p89 = scmp.ne.s32.totalorder %s74, %s88
      %p90 = scmp.eq.s32.totalorder %s22, 0
      %p91 = por %p89, %p90
      %s92 = ssub.s32 %s16, %s23
      %p93 = scmp.eq.s32.totalorder %s92, 0
      %s95 = sadd.s32 %s94, 1
      %s96 = scalar_select %p93, %s94, %s95
      %p99 = pneg %p93
      %p100 = scmp.eq.s32.totalorder %s16, 1
      %p101 = por %p99, %p100
      %p102 = scmp.ne.s32.totalorder %s94, %s97
      %p103 = scmp.eq.s32.totalorder %s16, 0
      %p104 = por %p102, %p103
      %p105 = scmp.ne.s32.totalorder %s94, %s97
      %p106 = scmp.eq.s32.totalorder %s21, 1
      %p107 = por %p105, %p106
      %p108 = scmp.ne.s32.totalorder %s97, %s98
      %p109 = scmp.eq.s32.totalorder %s21, 0
      %p110 = por %p108, %p109
      %p111 = scmp.ne.s32.totalorder %s97, %s98
      %p112 = scmp.eq.s32.totalorder %s22, 1
      %p113 = por %p111, %p112
      %p115 = scmp.ne.s32.totalorder %s98, %s114
      %p116 = scmp.eq.s32.totalorder %s22, 0
      %p117 = por %p115, %p116
      %p118 = scmp.le.s32.totalorder 1, %s16
      %p119 = scmp.lt.s32.totalorder %s16, 3
      %p120 = pnand %p118, %p119
      %p121 = pneg %p120
      // Predicated region
      $region9: #{tpu_custom_call.1} parent=5 // pred_check
        _
      $region10: #{tpu_custom_call.1} parent=5 // pred_check_branch
        %123 = sbr.rel (%p120) target = $region12
      $region11: #{tpu_custom_call.1} parent=5 // pred_region
        %s124 = ssub.s32 %s16, 1
        // Predicated region
        $region13: #{tpu_custom_call.1} parent=11 // pred_check
          %p125 = pneg %p63
        $region14: #{tpu_custom_call.1} parent=11 // pred_check_branch
          %127 = sbr.rel (%p125) target = $region16
        $region15: #{tpu_custom_call.1} parent=11 // pred_region
          %129 = vsyncadd [#allocation6], 0
          %s130 = sshll.u32 %s1, 4
          %s131 = int_to_ptr.hbm [resolvable:$true] %s130
          %s132 = sshll.u32 [#allocation5], 4
          %s133 = int_to_ptr.vmem [resolvable:$true] %s132
          %138 = dma.hbm_to_vmem [thread:$0]  %s131, 2048, %s133, [#allocation6], 128, 128, 8
        $region16: #{tpu_custom_call.1} parent=11 // pred_fallthru
          _
        // Predicated region
        $region17: #{tpu_custom_call.1} parent=11 // pred_check
          %p139 = pneg %p84
        $region18: #{tpu_custom_call.1} parent=11 // pred_check_branch
          %141 = sbr.rel (%p139) target = $region20
        $region19: #{tpu_custom_call.1} parent=11 // pred_region
          _
        $region20: #{tpu_custom_call.1} parent=11 // pred_fallthru
          _
      $region12: #{tpu_custom_call.1} parent=5 // pred_fallthru
        _
      %p142 = scmp.lt.s32.totalorder %s16, 2
      // Predicated region
      $region21: #{tpu_custom_call.1} parent=5 // pred_check
        %p143 = pneg %p142
      $region22: #{tpu_custom_call.1} parent=5 // pred_check_branch
        %145 = sbr.rel (%p143) target = $region24
      $region23: #{tpu_custom_call.1} parent=5 // pred_region
        // Predicated region
        $region25: #{tpu_custom_call.1} parent=23 // pred_check
          %p146 = pneg %p36
        $region26: #{tpu_custom_call.1} parent=23 // pred_check_branch
          %148 = sbr.rel (%p146) target = $region28
        $region27: #{tpu_custom_call.1} parent=23 // pred_region
          %s149 = sand.u32 %s26, 1
          %s150 = scalar_lea.sflag [#allocation3], %s149
          %s151 = sand.u32 %s26, 1
          %s152 = smul.addr %s151, 128
          %s153 = scalar_lea.vmem [#allocation2], %s152
          %s154 = smul.u32 16, %s16
          %156 = vsyncadd %s150, 0
          %s157 = smul.addr %s154, 8
          %s158 = scalar_lea.hbm %s0, %s157
          %s159 = sshll.u32 %s158, 4
          %s160 = int_to_ptr.hbm [resolvable:$true] %s159
          %s161 = sshll.u32 %s153, 4
          %s162 = int_to_ptr.vmem [resolvable:$true] %s161
          %167 = dma.hbm_to_vmem [thread:$0]  %s160, 2048, %s162, %s150, 128, 128, 8
        $region28: #{tpu_custom_call.1} parent=23 // pred_fallthru
          _
      $region24: #{tpu_custom_call.1} parent=5 // pred_fallthru
        _
      %p168 = scmp.le.s32.totalorder 1, %s16
      %p169 = scmp.lt.s32.totalorder %s16, 3
      %p170 = pnand %p168, %p169
      %p171 = pneg %p170
      // Predicated region
      $region29: #{tpu_custom_call.1} parent=5 // pred_check
        _
      $region30: #{tpu_custom_call.1} parent=5 // pred_check_branch
        %173 = sbr.rel (%p170) target = $region32
      $region31: #{tpu_custom_call.1} parent=5 // pred_region
        %s174 = ssub.s32 %s16, 1
        %s175 = sand.u32 %s29, 1
        %s176 = scalar_lea.sflag [#allocation3], %s175
        %s177 = sand.u32 %s29, 1
        %s178 = smul.addr %s177, 128
        %s179 = scalar_lea.vmem [#allocation2], %s178
        // Predicated region
        $region33: #{tpu_custom_call.1} parent=31 // pred_check
          %p180 = pneg %p42
        $region34: #{tpu_custom_call.1} parent=31 // pred_check_branch
          %182 = sbr.rel (%p180) target = $region36
        $region35: #{tpu_custom_call.1} parent=31 // pred_region
          %184 = dma.done %s176, 2048
        $region36: #{tpu_custom_call.1} parent=31 // pred_fallthru
          _
        // Predicated region
        $region37: #{tpu_custom_call.1} parent=31 // pred_check
          %p185 = pneg %p63
        $region38: #{tpu_custom_call.1} parent=31 // pred_check_branch
          %187 = sbr.rel (%p185) target = $region40
        $region39: #{tpu_custom_call.1} parent=31 // pred_region
          %189 = dma.done [#allocation6], 2048
        $region40: #{tpu_custom_call.1} parent=31 // pred_fallthru
          _
        %s190 = sand.u32 %s29, 1
        %s191 = scalar_lea.sflag [#allocation3], %s190
        %s192 = sand.u32 %s29, 1
        %s193 = smul.addr %s192, 128
        %s194 = scalar_lea.vmem [#allocation2], %s193
        %p195 = pneg %p42
        %p196 = pneg %p39
        %p197 = pneg %p63
        %p198 = pneg %p60
        %p199 = pneg %p84
        %p200 = pneg %p81
        %p201 = pneg %p110
        %p202 = pneg %p107
        %s203 = sand.u32 %s97, 1
        %s204 = scalar_lea.sflag [#allocation4], %s203
        %s205 = sand.u32 %s97, 1
        %s206 = smul.addr %s205, 128
        %s207 = scalar_lea.vmem [#allocation7], %s206
        %s208 = smul.u32 16, %s21
        %s209 = smul.u32 16, %s21
        %v210 = vld [vmem:[%s179] sm:$0xff]
        %v211 = vld [vmem:[%s179 + $0x8] sm:$0xff]
        %v212 = vld [vmem:[%s179 + $0x10] sm:$0xff]
        %v213 = vld [vmem:[%s179 + $0x18] sm:$0xff]
        %v214 = vld [vmem:[%s179 + $0x20] sm:$0xff]
        %v215 = vld [vmem:[%s179 + $0x28] sm:$0xff]
        %v216 = vld [vmem:[%s179 + $0x30] sm:$0xff]
        %v217 = vld [vmem:[%s179 + $0x38] sm:$0xff]
        %v218 = vld [vmem:[%s179 + $0x40] sm:$0xff]
        %v219 = vld [vmem:[%s179 + $0x48] sm:$0xff]
        %v220 = vld [vmem:[%s179 + $0x50] sm:$0xff]
        %v221 = vld [vmem:[%s179 + $0x58] sm:$0xff]
        %v222 = vld [vmem:[%s179 + $0x60] sm:$0xff]
        %v223 = vld [vmem:[%s179 + $0x68] sm:$0xff]
        %v224 = vld [vmem:[%s179 + $0x70] sm:$0xff]
        %v225 = vld [vmem:[%s179 + $0x78] sm:$0xff]
        %v226 = vld [vmem:[#allocation5] sm:$0xff]
        %v227 = vld [vmem:[#allocation5 + $0x8] sm:$0xff]
        %v228 = vld [vmem:[#allocation5 + $0x10] sm:$0xff]
        %v229 = vld [vmem:[#allocation5 + $0x18] sm:$0xff]
        %v230 = vld [vmem:[#allocation5 + $0x20] sm:$0xff]
        %v231 = vld [vmem:[#allocation5 + $0x28] sm:$0xff]
        %v232 = vld [vmem:[#allocation5 + $0x30] sm:$0xff]
        %v233 = vld [vmem:[#allocation5 + $0x38] sm:$0xff]
        %v234 = vld [vmem:[#allocation5 + $0x40] sm:$0xff]
        %v235 = vld [vmem:[#allocation5 + $0x48] sm:$0xff]
        %v236 = vld [vmem:[#allocation5 + $0x50] sm:$0xff]
        %v237 = vld [vmem:[#allocation5 + $0x58] sm:$0xff]
        %v238 = vld [vmem:[#allocation5 + $0x60] sm:$0xff]
        %v239 = vld [vmem:[#allocation5 + $0x68] sm:$0xff]
        %v240 = vld [vmem:[#allocation5 + $0x70] sm:$0xff]
        %v241 = vld [vmem:[#allocation5 + $0x78] sm:$0xff]
        %v242 = vld [vmem:[%s2] sm:$0x1]
        %v244 = vperm.slane %v242, 0
        %246 = vmatpush.xpose.msra.mxu0 %v241
        %247 = vmatpush.xpose.msra.mxu0 %v240
        %248 = vmatpush.xpose.msra.mxu0 %v239
        %249 = vmatpush.xpose.msra.mxu0 %v238
        %250 = vmatpush.xpose.msra.mxu0 %v237
        %251 = vmatpush.xpose.msra.mxu0 %v236
        %252 = vmatpush.xpose.msra.mxu0 %v235
        %253 = vmatpush.xpose.msra.mxu0 %v234
        %254 = vmatpush.xpose.msra.mxu0 %v233
        %255 = vmatpush.xpose.msra.mxu0 %v232
        %256 = vmatpush.xpose.msra.mxu0 %v231
        %257 = vmatpush.xpose.msra.mxu0 %v230
        %258 = vmatpush.xpose.msra.mxu0 %v229
        %259 = vmatpush.xpose.msra.mxu0 %v228
        %260 = vmatpush.xpose.msra.mxu0 %v227
        %261 = vmatpush.xpose.msra.mxu0 %v226
        %262 = vmatmul.f32.gmra.mxu0 %v210
        %v263 = vpop.f32.mrf.mxu0
        %v264 = vadd.f32 %v244, %v263
        %265 = vmatmul.f32.gmra.mxu0 %v211
        %v266 = vpop.f32.mrf.mxu0
        %v267 = vadd.f32 %v244, %v266
        %268 = vmatmul.f32.gmra.mxu0 %v212
        %v269 = vpop.f32.mrf.mxu0
        %v270 = vadd.f32 %v244, %v269
        %271 = vmatmul.f32.gmra.mxu0 %v213
        %v272 = vpop.f32.mrf.mxu0
        %v273 = vadd.f32 %v244, %v272
        %274 = vmatmul.f32.gmra.mxu0 %v214
        %v275 = vpop.f32.mrf.mxu0
        %v276 = vadd.f32 %v244, %v275
        %277 = vmatmul.f32.gmra.mxu0 %v215
        %v278 = vpop.f32.mrf.mxu0
        %v279 = vadd.f32 %v244, %v278
        %280 = vmatmul.f32.gmra.mxu0 %v216
        %v281 = vpop.f32.mrf.mxu0
        %v282 = vadd.f32 %v244, %v281
        %283 = vmatmul.f32.gmra.mxu0 %v217
        %v284 = vpop.f32.mrf.mxu0
        %v285 = vadd.f32 %v244, %v284
        %286 = vmatmul.f32.gmra.mxu0 %v218
        %v287 = vpop.f32.mrf.mxu0
        %v288 = vadd.f32 %v244, %v287
        %289 = vmatmul.f32.gmra.mxu0 %v219
        %v290 = vpop.f32.mrf.mxu0
        %v291 = vadd.f32 %v244, %v290
        %292 = vmatmul.f32.gmra.mxu0 %v220
        %v293 = vpop.f32.mrf.mxu0
        %v294 = vadd.f32 %v244, %v293
        %295 = vmatmul.f32.gmra.mxu0 %v221
        %v296 = vpop.f32.mrf.mxu0
        %v297 = vadd.f32 %v244, %v296
        %298 = vmatmul.f32.gmra.mxu0 %v222
        %v299 = vpop.f32.mrf.mxu0
        %v300 = vadd.f32 %v244, %v299
        %301 = vmatmul.f32.gmra.mxu0 %v223
        %v302 = vpop.f32.mrf.mxu0
        %v303 = vadd.f32 %v244, %v302
        %304 = vmatmul.f32.gmra.mxu0 %v224
        %v305 = vpop.f32.mrf.mxu0
        %v306 = vadd.f32 %v244, %v305
        %307 = vmatmul.f32.gmra.mxu0 %v225
        %v308 = vpop.f32.mrf.mxu0
        %v309 = vadd.f32 %v244, %v308
        %310 = vdwg.mxu0
        %311 = vst [vmem:[%s207] sm:$0xff] %v264
        %312 = vst [vmem:[%s207 + $0x8] sm:$0xff] %v267
        %313 = vst [vmem:[%s207 + $0x10] sm:$0xff] %v270
        %314 = vst [vmem:[%s207 + $0x18] sm:$0xff] %v273
        %315 = vst [vmem:[%s207 + $0x20] sm:$0xff] %v276
        %316 = vst [vmem:[%s207 + $0x28] sm:$0xff] %v279
        %317 = vst [vmem:[%s207 + $0x30] sm:$0xff] %v282
        %318 = vst [vmem:[%s207 + $0x38] sm:$0xff] %v285
        %319 = vst [vmem:[%s207 + $0x40] sm:$0xff] %v288
        %320 = vst [vmem:[%s207 + $0x48] sm:$0xff] %v291
        %321 = vst [vmem:[%s207 + $0x50] sm:$0xff] %v294
        %322 = vst [vmem:[%s207 + $0x58] sm:$0xff] %v297
        %323 = vst [vmem:[%s207 + $0x60] sm:$0xff] %v300
        %324 = vst [vmem:[%s207 + $0x68] sm:$0xff] %v303
        %325 = vst [vmem:[%s207 + $0x70] sm:$0xff] %v306
        %326 = vst [vmem:[%s207 + $0x78] sm:$0xff] %v309
        %s327 = sand.u32 %s97, 1
        %s328 = scalar_lea.sflag [#allocation4], %s327
        %s329 = sand.u32 %s97, 1
        %s330 = smul.addr %s329, 128
        %s331 = scalar_lea.vmem [#allocation7], %s330
        // Predicated region
        $region41: #{tpu_custom_call.1} parent=31 // pred_check
          %p332 = pneg %p107
        $region42: #{tpu_custom_call.1} parent=31 // pred_check_branch
          %334 = sbr.rel (%p332) target = $region44
        $region43: #{tpu_custom_call.1} parent=31 // pred_region
          %s335 = smul.u32 16, %s21
          %337 = vsyncadd %s328, 0
          %s338 = smul.addr %s335, 8
          %s339 = scalar_lea.hbm %s3, %s338
          %s340 = sshll.u32 %s331, 4
          %s341 = int_to_ptr.vmem [resolvable:$true] %s340
          %s342 = sshll.u32 %s339, 4
          %s343 = int_to_ptr.hbm [resolvable:$true] %s342
          %348 = dma.vmem_to_hbm [thread:$0]  %s341, 2048, %s343, %s328, 128, 128, 8
        $region44: #{tpu_custom_call.1} parent=31 // pred_fallthru
          _
      $region32: #{tpu_custom_call.1} parent=5 // pred_fallthru
        _
      %p349 = scmp.le.s32.totalorder 2, %s16
      // Predicated region
      $region45: #{tpu_custom_call.1} parent=5 // pred_check
        %p350 = pneg %p349
      $region46: #{tpu_custom_call.1} parent=5 // pred_check_branch
        %352 = sbr.rel (%p350) target = $region48
      $region47: #{tpu_custom_call.1} parent=5 // pred_region
        %s353 = ssub.s32 %s16, 2
        // Predicated region
        $region49: #{tpu_custom_call.1} parent=47 // pred_check
          %p354 = pneg %p113
        $region50: #{tpu_custom_call.1} parent=47 // pred_check_branch
          %356 = sbr.rel (%p354) target = $region52
        $region51: #{tpu_custom_call.1} parent=47 // pred_region
          %s357 = sand.u32 %s98, 1
          %s358 = scalar_lea.sflag [#allocation4], %s357
          %s359 = sand.u32 %s98, 1
          %s360 = smul.addr %s359, 128
          %s361 = scalar_lea.vmem [#allocation7], %s360
          %363 = dma.done %s358, 2048
        $region52: #{tpu_custom_call.1} parent=47 // pred_fallthru
          _
      $region48: #{tpu_custom_call.1} parent=5 // pred_fallthru
        _
    $region6: #{tpu_custom_call.1} parent=1 // loop_footer
      %s20 = sadd.s32 1, %s16
    $region7: #{tpu_custom_call.1} parent=1 // loop_footer_branch
      %15 = sbr.rel target = $region3
    $region8: #{tpu_custom_call.1} parent=1 // loop_exit
      _
    %364 = vsyncpa [#allocation3], 1
    %s365 = scalar_lea.sflag [#allocation3], 1
    %366 = vsyncpa %s365, 1
    %367 = vsyncpa [#allocation6], 1
    %368 = vsyncpa [#allocation4], 1
    %s369 = scalar_lea.sflag [#allocation4], 1
    %370 = vsyncpa %s369, 1

</llo_original>
